<compile_context>
chip_gen: v5e
topology: v5e:2x2
jax: 0.10.0
libtpu: 0.0.40
codegen_flags: <defaults>
</compile_context>

<pallas_src>
import math
import functools

import jax
import jax.numpy as jnp
from jax.experimental import pallas as pl
from jax.experimental.pallas import tpu as pltpu


# ------------------------------------------------------------------ helpers (inside kernels)

def _layernorm(v, g, b, eps=1e-5):
    mu = jnp.mean(v, axis=-1, keepdims=True)
    var = jnp.mean((v - mu) ** 2, axis=-1, keepdims=True)
    return (v - mu) * jax.lax.rsqrt(var + eps) * g + b


def _full_spec(shape):
    zeros = (0,) * len(shape)
    return pl.BlockSpec(shape, lambda *_: zeros)   # whole-array block, constant index map


# ------------------------------------------------------------------ Pallas kernels

def time_mlp_kernel(t_ref, wa_ref, ba_ref, wb_ref, bb_ref, out_ref, *, n_mlps, dim):
    # t: (B, D) ; wa: (D, 2L*D) ; ba: (1, 2L*D) ; wb: (2L, D, D) ; bb: (2L, 1, D)
    # out: (B, 1, 2L*D)   -- k = 2*l + s  (s=0 -> mlp_time_1 of layer l, s=1 -> mlp_time_2)
    h_cat = jnp.maximum(
        jnp.dot(t_ref[...], wa_ref[...], preferred_element_type=jnp.float32) + ba_ref[...],
        0.0)                                                        # (B, 2L*D)
    outs = []
    for k in range(n_mlps):                                         # static, tiny
        hk = h_cat[:, k * dim:(k + 1) * dim]                        # (B, D)
        outs.append(jnp.dot(hk, wb_ref[k], preferred_element_type=jnp.float32) + bb_ref[k])
    out_ref[...] = jnp.concatenate(outs, axis=-1)[:, None, :]       # (B, 1, 2L*D)


def vit_fused_kernel(xp_ref, tm_ref, pos_ref, wp_ref, bp_ref,
                     ln1g_ref, ln1b_ref, ln2g_ref, ln2b_ref,
                     wqkv_ref, bqkv_ref, wo_ref, bo_ref,
                     w1_ref, b1_ref, w2_ref, b2_ref,
                     lnfg_ref, lnfb_ref, wout_ref, bout_ref,
                     out_ref, *, num_layers, num_heads):
    # One grid step == one batch element; activation x stays on-chip across all layers.
    D = wp_ref.shape[1]
    H = num_heads
    hd = D // H
    scale = 1.0 / math.sqrt(D)   # PyTorch code scales by sqrt(dim_a) (full dim), not head dim

    # ---- patch embedding + positional encoding
    x = (jnp.dot(xp_ref[0], wp_ref[...], preferred_element_type=jnp.float32)
         + bp_ref[...] + pos_ref[...])                              # (T, D)

    tm_all = tm_ref[0]                                              # (1, 2L*D) precomputed time MLPs

    for l in range(num_layers):                                     # static unroll over layers
        tm1 = tm_all[:, (2 * l) * D:(2 * l + 1) * D]                # (1, D)
        tm2 = tm_all[:, (2 * l + 1) * D:(2 * l + 2) * D]            # (1, D)

        # ---- sublayer 1: pre-LN, time conditioning, multi-head attention, residual
        x_ = _layernorm(x, ln1g_ref[l], ln1b_ref[l]) + tm1          # (T, D)
        qkv = jnp.dot(x_, wqkv_ref[l], preferred_element_type=jnp.float32) + bqkv_ref[l]  # (T, 3D)
        q, k, v = qkv[:, :D], qkv[:, D:2 * D], qkv[:, 2 * D:]

        # head-batched attention: one score einsum, one softmax, one value einsum
        qh = jnp.stack([q[:, h * hd:(h + 1) * hd] for h in range(H)], axis=0)   # (H, T, hd)
        kh = jnp.stack([k[:, h * hd:(h + 1) * hd] for h in range(H)], axis=0)
        vh = jnp.stack([v[:, h * hd:(h + 1) * hd] for h in range(H)], axis=0)

        s = jnp.einsum('htd,hsd->hts', qh, kh,
                       preferred_element_type=jnp.float32) * scale               # (H, T, T)
        s = s - jnp.max(s, axis=-1, keepdims=True)
        e = jnp.exp(s)
        p = e * pl.reciprocal(jnp.sum(e, axis=-1, keepdims=True), approx=True)
        o = jnp.einsum('hts,hsd->htd', p, vh,
                       preferred_element_type=jnp.float32)                        # (H, T, hd)
        attn = jnp.concatenate([o[h] for h in range(H)], axis=-1)                 # (T, D)
        attn = jnp.dot(attn, wo_ref[l], preferred_element_type=jnp.float32) + bo_ref[l]
        x = x + attn                                                # dropout = identity (eval)

        # ---- sublayer 2: pre-LN, time conditioning, position-wise FFN, residual
        x_ = _layernorm(x, ln2g_ref[l], ln2b_ref[l]) + tm2
        hdn = jnp.maximum(
            jnp.dot(x_, w1_ref[l], preferred_element_type=jnp.float32) + b1_ref[l], 0.0)
        x = x + jnp.dot(hdn, w2_ref[l], preferred_element_type=jnp.float32) + b2_ref[l]

    # ---- final LayerNorm + out embedding
    xn = _layernorm(x, lnfg_ref[...], lnfb_ref[...])
    out_ref[0] = jnp.dot(xn, wout_ref[...], preferred_element_type=jnp.float32) + bout_ref[...]


# ------------------------------------------------------------------ pallas_call wrappers

def time_mlp_call(t_emb, wa_cat, ba_cat, wb, bb):
    B, D = t_emb.shape
    n = wb.shape[0]                       # 2L
    return pl.pallas_call(
        functools.partial(time_mlp_kernel, n_mlps=n, dim=D),
        out_shape=jax.ShapeDtypeStruct((B, 1, n * D), jnp.float32),
        grid=(1,),
        in_specs=[_full_spec(t_emb.shape), _full_spec(wa_cat.shape),
                  _full_spec(ba_cat.shape), _full_spec(wb.shape), _full_spec(bb.shape)],
        out_specs=_full_spec((B, 1, n * D)),
        compiler_params=pltpu.CompilerParams(dimension_semantics=("arbitrary",)),
    )(t_emb, wa_cat, ba_cat, wb, bb)


_STACKED_ORDER = ("ln1_g", "ln1_b", "ln2_g", "ln2_b",
                  "wqkv", "bqkv", "wo", "bo", "w1", "b1", "w2", "b2")


def vit_fused_call(xp, tm, params, num_layers, num_heads):
    B, T, P = xp.shape
    pos = params["pos_embed"][:T]                                   # (T, D) static slice (glue)
    weights = ([pos, params["patch_embed_w"], params["patch_embed_b"]]
               + [params[n] for n in _STACKED_ORDER]
               + [params["ln_g"], params["ln_b"], params["out_w"], params["out_b"]])
    in_specs = ([pl.BlockSpec((1, T, P), lambda b: (b, 0, 0)),
                 pl.BlockSpec((1, 1, tm.shape[-1]), lambda b: (b, 0, 0))]
                + [_full_spec(w.shape) for w in weights])
    return pl.pallas_call(
        functools.partial(vit_fused_kernel, num_layers=num_layers, num_heads=num_heads),
        out_shape=jax.ShapeDtypeStruct((B, T, P), jnp.float32),
        grid=(B,),
        in_specs=in_specs,
        out_specs=pl.BlockSpec((1, T, P), lambda b: (b, 0, 0)),
        compiler_params=pltpu.CompilerParams(
            dimension_semantics=("parallel",),              # v7x: one batch element per TC
            vmem_limit_bytes=32 * 1024 * 1024),             # weights here are tiny; explicit anyway
    )(xp, tm, *weights)


# ------------------------------------------------------------------ parameters / embeddings

def make_embedding(dim, max_length=10000):
    position = jnp.arange(max_length, dtype=jnp.float32)[:, None]
    div_term = jnp.exp(jnp.arange(0, dim, 2, dtype=jnp.float32)
                       * (-math.log(max_length / 2 / math.pi) / dim))
    ang = position * div_term
    emb = jnp.zeros((max_length, dim), jnp.float32)
    emb = emb.at[:, 0::2].set(jnp.sin(ang))
    emb = emb.at[:, 1::2].set(jnp.cos(ang))
    return emb


def _xavier_normal(key, fan_in, fan_out):
    std = math.sqrt(2.0 / (fan_in + fan_out))
    return jax.random.normal(key, (fan_in, fan_out), jnp.float32) * std


def _kaiming_normal(key, fan_in, fan_out):
    std = math.sqrt(2.0 / fan_in)
    return jax.random.normal(key, (fan_in, fan_out), jnp.float32) * std


def _default_linear_w(key, fan_in, fan_out):
    bound = 1.0 / math.sqrt(fan_in)
    return jax.random.uniform(key, (fan_in, fan_out), jnp.float32, -bound, bound)


def init_params(key, in_dim, embed_dim, num_layers, patch_shape):
    ph, pw = patch_shape
    P = in_dim * ph * pw
    D = embed_dim
    Dh = 4 * D
    keys = jax.random.split(key, 2 + num_layers)
    zD = jnp.zeros((1, D), jnp.float32)

    blocks = []
    for i in range(num_layers):
        lk = jax.random.split(keys[2 + i], 10)
        blocks.append({
            "g1": jnp.ones((1, D), jnp.float32), "be1": zD,
            "g2": jnp.ones((1, D), jnp.float32), "be2": zD,
            "wt1a": _default_linear_w(lk[0], D, D), "bt1a": zD,
            "wt1b": _default_linear_w(lk[1], D, D), "bt1b": zD,
            "wt2a": _default_linear_w(lk[2], D, D), "bt2a": zD,
            "wt2b": _default_linear_w(lk[3], D, D), "bt2b": zD,
            "wq": _xavier_normal(lk[4], D, D), "bq": zD,
            "wk": _xavier_normal(lk[5], D, D), "bk": zD,
            "wv": _xavier_normal(lk[6], D, D), "bv": zD,
            "wo": _xavier_normal(lk[7], D, D), "bo": zD,
            "w1": _kaiming_normal(lk[8], D, Dh), "b1": jnp.zeros((1, Dh), jnp.float32),
            "w2": _kaiming_normal(lk[9], Dh, D), "b2": zD,
        })

    def stack(name):
        return jnp.stack([b[name] for b in blocks], axis=0)

    params = {
        "patch_embed_w": _default_linear_w(keys[0], P, D),
        "patch_embed_b": jnp.zeros((1, D), jnp.float32),
        "out_w": _default_linear_w(keys[1], D, P),
        "out_b": jnp.zeros((1, P), jnp.float32),
        "ln_g": jnp.ones((1, D), jnp.float32),
        "ln_b": jnp.zeros((1, D), jnp.float32),
        "pos_embed": make_embedding(D),
        "time_embed": make_embedding(D),
        # stacked per-layer encoder weights (L, ...) with QKV fused along the output dim
        "ln1_g": stack("g1"), "ln1_b": stack("be1"),
        "ln2_g": stack("g2"), "ln2_b": stack("be2"),
        "wqkv": jnp.concatenate([stack("wq"), stack("wk"), stack("wv")], axis=-1),   # (L, D, 3D)
        "bqkv": jnp.concatenate([stack("bq"), stack("bk"), stack("bv")], axis=-1),   # (L, 1, 3D)
        "wo": stack("wo"), "bo": stack("bo"),
        "w1": stack("w1"), "b1": stack("b1"),
        "w2": stack("w2"), "b2": stack("b2"),
        # time-MLP weights, k = 2*l + s  (s=0 -> mlp_time_1, s=1 -> mlp_time_2)
        "t_wa_cat": jnp.concatenate(
            [blocks[l][n] for l in range(num_layers) for n in ("wt1a", "wt2a")], axis=-1),  # (D, 2L*D)
        "t_ba_cat": jnp.concatenate(
            [blocks[l][n] for l in range(num_layers) for n in ("bt1a", "bt2a")], axis=-1),  # (1, 2L*D)
        "t_wb": jnp.stack(
            [blocks[l][n] for l in range(num_layers) for n in ("wt1b", "wt2b")], axis=0),   # (2L, D, D)
        "t_bb": jnp.stack(
            [blocks[l][n] for l in range(num_layers) for n in ("bt1b", "bt2b")], axis=0),   # (2L, 1, D)
    }
    return params


# ------------------------------------------------------------------ ViT forward

def vit_forward(x, t, params, patch_shape, num_heads=8):
    ph, pw = patch_shape
    B, C, H, W = x.shape
    gh, gw = H // ph, W // pw
    T = gh * gw
    num_layers = params["wqkv"].shape[0]

    # patchify: 'b c (h ph) (w pw) -> b (h w) (ph pw c)'   (layout glue only)
    xp = x.reshape(B, C, gh, ph, gw, pw).transpose(0, 2, 4, 3, 5, 1).reshape(B, T, ph * pw * C)
    xp = xp.astype(jnp.float32)

    t_emb = params["time_embed"][t]                    # (B, D) table gather (glue)

    # time-conditioning MLPs for all batch elements / layers in one small kernel
    tm = time_mlp_call(t_emb, params["t_wa_cat"], params["t_ba_cat"],
                       params["t_wb"], params["t_bb"])

    # fused: patch embed + all encoder blocks + final LN + out embed, one pallas_call
    out = vit_fused_call(xp, tm, params, num_layers, num_heads)

    # unpatchify: 'b (h w) (ph pw c) -> b c (h ph) (w pw)'
    out = out.reshape(B, gh, gw, ph, pw, C).transpose(0, 5, 1, 3, 2, 4).reshape(
        B, C, gh * ph, gw * pw)
    return out


# ------------------------------------------------------------------ main

if __name__ == "__main__":
    in_dim, embed_dim, num_layers, patch_shape = 4, 32, 2, (4, 4)
    B, H, W = 2, 16, 16
    num_heads = 8

    key = jax.random.PRNGKey(0)
    kp, kx, kt = jax.random.split(key, 3)
    params = init_params(kp, in_dim, embed_dim, num_layers, patch_shape)

    x = jax.random.normal(kx, (B, in_dim, H, W), jnp.float32)
    t = jax.random.randint(kt, (B,), 0, 1000)

    out = vit_forward(x, t, params, patch_shape, num_heads=num_heads)
    out = jax.block_until_ready(out)
    assert out.shape == (B, in_dim, H, W), out.shape
    assert jnp.all(jnp.isfinite(out))
    print("KERNEL_OK")
</pallas_src>

<mosaic_0001>
module attributes {stable_mosaic.version = 11 : i64} {
  func.func @time_mlp_kernel(%arg0: i32, %arg1: memref<2x32xf32, #tpu.memory_space<vmem>>, %arg2: memref<32x128xf32, #tpu.memory_space<vmem>>, %arg3: memref<1x128xf32, #tpu.memory_space<vmem>>, %arg4: memref<4x32x32xf32, #tpu.memory_space<vmem>>, %arg5: memref<4x1x32xf32, #tpu.memory_space<vmem>>, %arg6: memref<2x1x128xf32, #tpu.memory_space<vmem>>) attributes {dimension_semantics = [#tpu.dimension_semantics<arbitrary>], iteration_bounds = array<i64: 1>, scalar_prefetch = 0 : i64, scratch_operands = 0 : i64, tpu.core_type = #tpu.core_type<tc>, window_params = [{pipeline_mode = #tpu.pipeline_mode<synchronous>, transform_indices = @transform_0, window_bounds = array<i64: 2, 32>}, {pipeline_mode = #tpu.pipeline_mode<synchronous>, transform_indices = @transform_1, window_bounds = array<i64: 32, 128>}, {pipeline_mode = #tpu.pipeline_mode<synchronous>, transform_indices = @transform_2, window_bounds = array<i64: 1, 128>}, {pipeline_mode = #tpu.pipeline_mode<synchronous>, transform_indices = @transform_3, window_bounds = array<i64: 4, 32, 32>}, {pipeline_mode = #tpu.pipeline_mode<synchronous>, transform_indices = @transform_4, window_bounds = array<i64: 4, 1, 32>}, {pipeline_mode = #tpu.pipeline_mode<synchronous>, transform_indices = @transform_5, window_bounds = array<i64: 2, 1, 128>}]} {
    %c0 = arith.constant 0 : index
    %c0_0 = arith.constant 0 : index
    %0 = vector.load %arg1[%c0, %c0_0] : memref<2x32xf32, #tpu.memory_space<vmem>>, vector<2x32xf32>
    %c0_1 = arith.constant 0 : index
    %c0_2 = arith.constant 0 : index
    %1 = vector.load %arg2[%c0_1, %c0_2] : memref<32x128xf32, #tpu.memory_space<vmem>>, vector<32x128xf32>
    %cst = arith.constant dense<0.000000e+00> : vector<2x128xf32>
    %2 = tpu.matmul %0, %1, %cst {dimension_numbers = #tpu.dot_dimension_numbers<[1], [0], [0], [1], [0, 0, 1, 1], [], []>} : vector<2x32xf32>, vector<32x128xf32>, vector<2x128xf32> -> vector<2x128xf32>
    %c0_3 = arith.constant 0 : index
    %c0_4 = arith.constant 0 : index
    %3 = vector.load %arg3[%c0_3, %c0_4] : memref<1x128xf32, #tpu.memory_space<vmem>>, vector<1x128xf32>
    %4 = vector.broadcast %3 : vector<1x128xf32> to vector<2x128xf32>
    %5 = arith.addf %2, %4 : vector<2x128xf32>
    %cst_5 = arith.constant 0.000000e+00 : f32
    %6 = vector.broadcast %cst_5 : f32 to vector<2x128xf32>
    %7 = arith.maximumf %5, %6 : vector<2x128xf32>
    %8 = vector.extract_strided_slice %7 {offsets = [0, 0], sizes = [2, 32], strides = [1, 1]} : vector<2x128xf32> to vector<2x32xf32>
    %c0_6 = arith.constant 0 : index
    %c0_7 = arith.constant 0 : index
    %c0_8 = arith.constant 0 : index
    %9 = vector.load %arg4[%c0_6, %c0_7, %c0_8] : memref<4x32x32xf32, #tpu.memory_space<vmem>>, vector<1x32x32xf32>
    %10 = vector.shape_cast %9 : vector<1x32x32xf32> to vector<32x32xf32>
    %cst_9 = arith.constant dense<0.000000e+00> : vector<2x32xf32>
    %11 = tpu.matmul %8, %10, %cst_9 {dimension_numbers = #tpu.dot_dimension_numbers<[1], [0], [0], [1], [0, 0, 1, 1], [], []>} : vector<2x32xf32>, vector<32x32xf32>, vector<2x32xf32> -> vector<2x32xf32>
    %c0_10 = arith.constant 0 : index
    %c0_11 = arith.constant 0 : index
    %c0_12 = arith.constant 0 : index
    %12 = vector.load %arg5[%c0_10, %c0_11, %c0_12] : memref<4x1x32xf32, #tpu.memory_space<vmem>>, vector<1x1x32xf32>
    %13 = vector.shape_cast %12 : vector<1x1x32xf32> to vector<1x32xf32>
    %14 = vector.broadcast %13 : vector<1x32xf32> to vector<2x32xf32>
    %15 = arith.addf %11, %14 : vector<2x32xf32>
    %16 = vector.extract_strided_slice %7 {offsets = [0, 32], sizes = [2, 32], strides = [1, 1]} : vector<2x128xf32> to vector<2x32xf32>
    %c1 = arith.constant 1 : index
    %c0_13 = arith.constant 0 : index
    %c0_14 = arith.constant 0 : index
    %17 = vector.load %arg4[%c1, %c0_13, %c0_14] : memref<4x32x32xf32, #tpu.memory_space<vmem>>, vector<1x32x32xf32>
    %18 = vector.shape_cast %17 : vector<1x32x32xf32> to vector<32x32xf32>
    %cst_15 = arith.constant dense<0.000000e+00> : vector<2x32xf32>
    %19 = tpu.matmul %16, %18, %cst_15 {dimension_numbers = #tpu.dot_dimension_numbers<[1], [0], [0], [1], [0, 0, 1, 1], [], []>} : vector<2x32xf32>, vector<32x32xf32>, vector<2x32xf32> -> vector<2x32xf32>
    %c1_16 = arith.constant 1 : index
    %c0_17 = arith.constant 0 : index
    %c0_18 = arith.constant 0 : index
    %20 = vector.load %arg5[%c1_16, %c0_17, %c0_18] : memref<4x1x32xf32, #tpu.memory_space<vmem>>, vector<1x1x32xf32>
    %21 = vector.shape_cast %20 : vector<1x1x32xf32> to vector<1x32xf32>
    %22 = vector.broadcast %21 : vector<1x32xf32> to vector<2x32xf32>
    %23 = arith.addf %19, %22 : vector<2x32xf32>
    %24 = vector.extract_strided_slice %7 {offsets = [0, 64], sizes = [2, 32], strides = [1, 1]} : vector<2x128xf32> to vector<2x32xf32>
    %c2 = arith.constant 2 : index
    %c0_19 = arith.constant 0 : index
    %c0_20 = arith.constant 0 : index
    %25 = vector.load %arg4[%c2, %c0_19, %c0_20] : memref<4x32x32xf32, #tpu.memory_space<vmem>>, vector<1x32x32xf32>
    %26 = vector.shape_cast %25 : vector<1x32x32xf32> to vector<32x32xf32>
    %cst_21 = arith.constant dense<0.000000e+00> : vector<2x32xf32>
    %27 = tpu.matmul %24, %26, %cst_21 {dimension_numbers = #tpu.dot_dimension_numbers<[1], [0], [0], [1], [0, 0, 1, 1], [], []>} : vector<2x32xf32>, vector<32x32xf32>, vector<2x32xf32> -> vector<2x32xf32>
    %c2_22 = arith.constant 2 : index
    %c0_23 = arith.constant 0 : index
    %c0_24 = arith.constant 0 : index
    %28 = vector.load %arg5[%c2_22, %c0_23, %c0_24] : memref<4x1x32xf32, #tpu.memory_space<vmem>>, vector<1x1x32xf32>
    %29 = vector.shape_cast %28 : vector<1x1x32xf32> to vector<1x32xf32>
    %30 = vector.broadcast %29 : vector<1x32xf32> to vector<2x32xf32>
    %31 = arith.addf %27, %30 : vector<2x32xf32>
    %32 = vector.extract_strided_slice %7 {offsets = [0, 96], sizes = [2, 32], strides = [1, 1]} : vector<2x128xf32> to vector<2x32xf32>
    %c3 = arith.constant 3 : index
    %c0_25 = arith.constant 0 : index
    %c0_26 = arith.constant 0 : index
    %33 = vector.load %arg4[%c3, %c0_25, %c0_26] : memref<4x32x32xf32, #tpu.memory_space<vmem>>, vector<1x32x32xf32>
    %34 = vector.shape_cast %33 : vector<1x32x32xf32> to vector<32x32xf32>
    %cst_27 = arith.constant dense<0.000000e+00> : vector<2x32xf32>
    %35 = tpu.matmul %32, %34, %cst_27 {dimension_numbers = #tpu.dot_dimension_numbers<[1], [0], [0], [1], [0, 0, 1, 1], [], []>} : vector<2x32xf32>, vector<32x32xf32>, vector<2x32xf32> -> vector<2x32xf32>
    %c3_28 = arith.constant 3 : index
    %c0_29 = arith.constant 0 : index
    %c0_30 = arith.constant 0 : index
    %36 = vector.load %arg5[%c3_28, %c0_29, %c0_30] : memref<4x1x32xf32, #tpu.memory_space<vmem>>, vector<1x1x32xf32>
    %37 = vector.shape_cast %36 : vector<1x1x32xf32> to vector<1x32xf32>
    %38 = vector.broadcast %37 : vector<1x32xf32> to vector<2x32xf32>
    %39 = arith.addf %35, %38 : vector<2x32xf32>
    %40 = tpu.concatenate %15, %23, %31, %39 in 1 : vector<2x32xf32>, vector<2x32xf32>, vector<2x32xf32>, vector<2x32xf32> -> vector<2x128xf32>
    %41 = vector.shape_cast %40 : vector<2x128xf32> to vector<2x1x128xf32>
    %c0_31 = arith.constant 0 : index
    %c0_32 = arith.constant 0 : index
    %c0_33 = arith.constant 0 : index
    %42 = vector.load %arg6[%c0_31, %c0_32, %c0_33] : memref<2x1x128xf32, #tpu.memory_space<vmem>>, vector<2x1x128xf32>
    tpu.vector_store %arg6[%c0_31, %c0_32, %c0_33], %41 {strides = array<i32>} : memref<2x1x128xf32, #tpu.memory_space<vmem>>, vector<2x1x128xf32>,
    return
  }
  func.func @transform_0(%arg0: i32) -> (i32, i32) {
    %c0_i32 = arith.constant 0 : i32
    %c0_i32_0 = arith.constant 0 : i32
    %c0_i32_1 = arith.constant 0 : i32
    return %c0_i32, %c0_i32_0 : i32, i32
  }
  func.func @transform_1(%arg0: i32) -> (i32, i32) {
    %c0_i32 = arith.constant 0 : i32
    %c0_i32_0 = arith.constant 0 : i32
    %c0_i32_1 = arith.constant 0 : i32
    return %c0_i32, %c0_i32_0 : i32, i32
  }
  func.func @transform_2(%arg0: i32) -> (i32, i32) {
    %c0_i32 = arith.constant 0 : i32
    %c0_i32_0 = arith.constant 0 : i32
    %c0_i32_1 = arith.constant 0 : i32
    return %c0_i32, %c0_i32_0 : i32, i32
  }
  func.func @transform_3(%arg0: i32) -> (i32, i32, i32) {
    %c0_i32 = arith.constant 0 : i32
    %c0_i32_0 = arith.constant 0 : i32
    %c0_i32_1 = arith.constant 0 : i32
    %c0_i32_2 = arith.constant 0 : i32
    return %c0_i32, %c0_i32_0, %c0_i32_1 : i32, i32, i32
  }
  func.func @transform_4(%arg0: i32) -> (i32, i32, i32) {
    %c0_i32 = arith.constant 0 : i32
    %c0_i32_0 = arith.constant 0 : i32
    %c0_i32_1 = arith.constant 0 : i32
    %c0_i32_2 = arith.constant 0 : i32
    return %c0_i32, %c0_i32_0, %c0_i32_1 : i32, i32, i32
  }
  func.func @transform_5(%arg0: i32) -> (i32, i32, i32) {
    %c0_i32 = arith.constant 0 : i32
    %c0_i32_0 = arith.constant 0 : i32
    %c0_i32_1 = arith.constant 0 : i32
    %c0_i32_2 = arith.constant 0 : i32
    return %c0_i32, %c0_i32_0, %c0_i32_1 : i32, i32, i32
  }
}

</mosaic_0001>

<llo_original>
// kernel: tpu_custom_call.1
$region0: #{tpu_custom_call.1}
  #allocation0 [shape = 'u32[]', space=smem, size = 0x4, offset = 0x4, fixed_abs, tag = 'smem constant byte address 0x4 - core index']
  #allocation1 [shape = 'u32[72,128]{1,0:T(1,128)}', space=vmem, size = 0x9000, scoped, tag = 'internal scratch']
  %s0 = inlined_call_operand.hbm [shape: f32[2,32], index: 0, kind: input, shape index: {}]
  %s1 = inlined_call_operand.hbm [shape: f32[32,128], index: 1, kind: input, shape index: {}]
  %s2 = inlined_call_operand.vmem [shape: f32[1,128], index: 2, kind: input, shape index: {}]
  %s3 = inlined_call_operand.hbm [shape: f32[4,32,32], index: 3, kind: input, shape index: {}]
  %s4 = inlined_call_operand.hbm [shape: f32[4,1,32], index: 4, kind: input, shape index: {}]
  %s5 = inlined_call_operand.hbm [shape: f32[2,1,128], index: 5, kind: output, shape index: {}]
  %s6 = sld [smem:[#allocation0]]
  $region46: #{tpu_custom_call.1} parent=0
    _
  %s8 = ssub.s32 1, %s6
  %s9 = scalar_select 0, %s8, %s6
  $region1: #{tpu_custom_call.1} parent=0
    #allocation2 [shape = 'u8[1024]{0}', space=vmem, size = 0x400, scoped, tag = 'input window, operand 0, single buffered']
    #allocation3 [shape = 's32[1]{0}', space=sflag, size = 0x4, scoped, tag = 'scoped memory for tpu_custom_call.1']
    #allocation4 [shape = 's32[1]{0}', space=sflag, size = 0x4, scoped, tag = 'scoped memory for tpu_custom_call.1']
    #allocation5 [shape = 'u8[16384]{0}', space=vmem, size = 0x4000, scoped, tag = 'input window, operand 1, single buffered']
    #allocation6 [shape = 's32[1]{0}', space=sflag, size = 0x4, scoped, tag = 'scoped memory for tpu_custom_call.1']
    #allocation7 [shape = 'u8[65536]{0}', space=vmem, size = 0x10000, scoped, tag = 'input window, operand 3, single buffered']
    #allocation8 [shape = 'u8[2048]{0}', space=vmem, size = 0x800, scoped, tag = 'input window, operand 4, single buffered']
    #allocation9 [shape = 's32[1]{0}', space=sflag, size = 0x4, scoped, tag = 'scoped memory for tpu_custom_call.1']
    #allocation10 [shape = 'u8[1024]{0}', space=vmem, size = 0x400, scoped, tag = 'output window, operand 0, single buffered']
    %10 = vsyncpa [#allocation3], 0
    %11 = vsyncpa [#allocation6], 0
    %12 = vsyncpa [#allocation9], 0
    %13 = vsyncpa [#allocation4], 0
    // Predicated region
    $region2: #{tpu_custom_call.1} parent=1 // pred_check
      _
    $region3: #{tpu_custom_call.1} parent=1 // pred_check_branch
      %15 = sbr.rel (0) target = $region5
    $region4: #{tpu_custom_call.1} parent=1 // pred_region
      %17 = vsyncadd [#allocation3], 0
      %s19 = sshll.u32 %s0, 4
      %s20 = int_to_ptr.hbm [resolvable:$true] %s19
      %s21 = sshll.u32 [#allocation2], 4
      %s22 = int_to_ptr.vmem [resolvable:$true] %s21
      %24 = dma.hbm_to_vmem [thread:$0]  %s20, 32, %s22, [#allocation3]
    $region5: #{tpu_custom_call.1} parent=1 // pred_fallthru
      _
    // Predicated region
    $region6: #{tpu_custom_call.1} parent=1 // pred_check
      _
    $region7: #{tpu_custom_call.1} parent=1 // pred_check_branch
      %26 = sbr.rel (0) target = $region9
    $region8: #{tpu_custom_call.1} parent=1 // pred_region
      %28 = vsyncadd [#allocation6], 0
      %s29 = sshll.u32 %s1, 4
      %s30 = int_to_ptr.hbm [resolvable:$true] %s29
      %s31 = sshll.u32 [#allocation5], 4
      %s32 = int_to_ptr.vmem [resolvable:$true] %s31
      %37 = dma.hbm_to_vmem [thread:$0]  %s30, 512, %s32, [#allocation6], 128, 128, 8
    $region9: #{tpu_custom_call.1} parent=1 // pred_fallthru
      _
    // Predicated region
    $region10: #{tpu_custom_call.1} parent=1 // pred_check
      _
    $region11: #{tpu_custom_call.1} parent=1 // pred_check_branch
      %39 = sbr.rel (0) target = $region13
    $region12: #{tpu_custom_call.1} parent=1 // pred_region
      _
    $region13: #{tpu_custom_call.1} parent=1 // pred_fallthru
      _
    // Predicated region
    $region14: #{tpu_custom_call.1} parent=1 // pred_check
      _
    $region15: #{tpu_custom_call.1} parent=1 // pred_check_branch
      %41 = sbr.rel (0) target = $region17
    $region16: #{tpu_custom_call.1} parent=1 // pred_region
      %43 = vsyncadd [#allocation6], 0
      %s44 = sshll.u32 %s3, 4
      %s45 = int_to_ptr.hbm [resolvable:$true] %s44
      %s46 = sshll.u32 [#allocation7], 4
      %s47 = int_to_ptr.vmem [resolvable:$true] %s46
      %52 = dma.hbm_to_vmem [thread:$0]  %s45, 2048, %s47, [#allocation6], 128, 128, 8
    $region17: #{tpu_custom_call.1} parent=1 // pred_fallthru
      _
    // Predicated region
    $region18: #{tpu_custom_call.1} parent=1 // pred_check
      _
    $region19: #{tpu_custom_call.1} parent=1 // pred_check_branch
      %54 = sbr.rel (0) target = $region21
    $region20: #{tpu_custom_call.1} parent=1 // pred_region
      %56 = vsyncadd [#allocation9], 0
      %s57 = sshll.u32 %s4, 4
      %s58 = int_to_ptr.hbm [resolvable:$true] %s57
      %s59 = sshll.u32 [#allocation8], 4
      %s60 = int_to_ptr.vmem [resolvable:$true] %s59
      %65 = dma.hbm_to_vmem [thread:$0]  %s58, 64, %s60, [#allocation9], 16, 16, 1
    $region21: #{tpu_custom_call.1} parent=1 // pred_fallthru
      _
    // Predicated region
    $region22: #{tpu_custom_call.1} parent=1 // pred_check
      _
    $region23: #{tpu_custom_call.1} parent=1 // pred_check_branch
      %67 = sbr.rel (0) target = $region25
    $region24: #{tpu_custom_call.1} parent=1 // pred_region
      %69 = dma.done [#allocation3], 32
    $region25: #{tpu_custom_call.1} parent=1 // pred_fallthru
      _
    // Predicated region
    $region26: #{tpu_custom_call.1} parent=1 // pred_check
      _
    $region27: #{tpu_custom_call.1} parent=1 // pred_check_branch
      %71 = sbr.rel (0) target = $region29
    $region28: #{tpu_custom_call.1} parent=1 // pred_region
      %73 = dma.done [#allocation6], 512
    $region29: #{tpu_custom_call.1} parent=1 // pred_fallthru
      _
    // Predicated region
    $region30: #{tpu_custom_call.1} parent=1 // pred_check
      _
    $region31: #{tpu_custom_call.1} parent=1 // pred_check_branch
      %75 = sbr.rel (0) target = $region33
    $region32: #{tpu_custom_call.1} parent=1 // pred_region
      %77 = dma.done [#allocation6], 2048
    $region33: #{tpu_custom_call.1} parent=1 // pred_fallthru
      _
    // Predicated region
    $region34: #{tpu_custom_call.1} parent=1 // pred_check
      _
    $region35: #{tpu_custom_call.1} parent=1 // pred_check_branch
      %79 = sbr.rel (0) target = $region37
    $region36: #{tpu_custom_call.1} parent=1 // pred_region
      %81 = dma.done [#allocation9], 64
    $region37: #{tpu_custom_call.1} parent=1 // pred_fallthru
      _
    %v82 = vld [vmem:[#allocation2] sm:$0x3]
    %v83 = vld [vmem:[#allocation5] sm:$0xff]
    %v84 = vld [vmem:[#allocation5 + $0x8] sm:$0xff]
    %v85 = vld [vmem:[#allocation5 + $0x10] sm:$0xff]
    %v86 = vld [vmem:[#allocation5 + $0x18] sm:$0xff]
    %v87 = vld [vmem:[%s2] sm:$0x1]
    %v89 = vperm.slane %v87, 0
    %vm91 = vcmask 261120
    %v93 = vsel %vm91, %v82, 0
    %95 = vmatpush.msra.mxu0 0.0
    %96 = vmatpush.msra.mxu0 0.0
    %97 = vmatpush.msra.mxu0 0.0
    %98 = vmatpush.msra.mxu0 0.0
    %99 = vmatpush.msra.mxu0 0.0
    %100 = vmatpush.msra.mxu0 0.0
    %101 = vmatpush.msra.mxu0 0.0
    %102 = vmatpush.msra.mxu0 0.0
    %103 = vmatpush.msra.mxu0 0.0
    %104 = vmatpush.msra.mxu0 0.0
    %105 = vmatpush.msra.mxu0 0.0
    %106 = vmatpush.msra.mxu0 0.0
    %107 = vmatpush.msra.mxu0 %v86
    %108 = vmatpush.msra.mxu0 %v85
    %109 = vmatpush.msra.mxu0 %v84
    %110 = vmatpush.msra.mxu0 %v83
    %111 = vmatmul.f32.gmra.mxu0 %v93
    %v112 = vpop.f32.mrf.mxu0
    %v113 = vadd.f32 %v89, %v112
    %114 = vdwg.mxu0
    %v115 = vmax.f32 %v113, 0.0
    %v116 = vld [vmem:[#allocation7] sm:$0xff]
    %v117 = vld [vmem:[#allocation7 + $0x8] sm:$0xff]
    %v118 = vld [vmem:[#allocation7 + $0x10] sm:$0xff]
    %v119 = vld [vmem:[#allocation7 + $0x18] sm:$0xff]
    %v120 = vld [vmem:[#allocation8] sm:$0x1]
    %v122 = vperm.slane %v120, 0
    %v125 = vsel %vm91, %v115, 0
    %127 = vmatpush.msra.mxu0 0.0
    %128 = vmatpush.msra.mxu0 0.0
    %129 = vmatpush.msra.mxu0 0.0
    %130 = vmatpush.msra.mxu0 0.0
    %131 = vmatpush.msra.mxu0 0.0
    %132 = vmatpush.msra.mxu0 0.0
    %133 = vmatpush.msra.mxu0 0.0
    %134 = vmatpush.msra.mxu0 0.0
    %135 = vmatpush.msra.mxu0 0.0
    %136 = vmatpush.msra.mxu0 0.0
    %137 = vmatpush.msra.mxu0 0.0
    %138 = vmatpush.msra.mxu0 0.0
    %139 = vmatpush.msra.mxu0 %v119
    %140 = vmatpush.msra.mxu0 %v118
    %141 = vmatpush.msra.mxu0 %v117
    %142 = vmatpush.msra.mxu0 %v116
    %143 = vmatmul.f32.gmra.mxu0 %v125
    %v144 = vpop.f32.mrf.mxu0
    %v145 = vadd.f32 %v122, %v144
    %146 = vdwg.mxu0
    %s147 = scalar_lea.vmem [#allocation7], 32
    %v148 = vld [vmem:[%s147] sm:$0xff]
    %v149 = vld [vmem:[%s147 + $0x8] sm:$0xff]
    %v150 = vld [vmem:[%s147 + $0x10] sm:$0xff]
    %v151 = vld [vmem:[%s147 + $0x18] sm:$0xff]
    %s152 = scalar_lea.vmem [#allocation8], 1
    %v153 = vld [vmem:[%s152] sm:$0x1]
    %v155 = vperm.slane %v153, 0
    %157 = vrot.lane.b32.xlu0 %v115, 96
    %v158 = vpop.permute.xlu0 %157
    %v159 = vsel %vm91, %v158, 0
    %161 = vmatpush.msra.mxu0 0.0
    %162 = vmatpush.msra.mxu0 0.0
    %163 = vmatpush.msra.mxu0 0.0
    %164 = vmatpush.msra.mxu0 0.0
    %165 = vmatpush.msra.mxu0 0.0
    %166 = vmatpush.msra.mxu0 0.0
    %167 = vmatpush.msra.mxu0 0.0
    %168 = vmatpush.msra.mxu0 0.0
    %169 = vmatpush.msra.mxu0 0.0
    %170 = vmatpush.msra.mxu0 0.0
    %171 = vmatpush.msra.mxu0 0.0
    %172 = vmatpush.msra.mxu0 0.0
    %173 = vmatpush.msra.mxu0 %v151
    %174 = vmatpush.msra.mxu0 %v150
    %175 = vmatpush.msra.mxu0 %v149
    %176 = vmatpush.msra.mxu0 %v148
    %177 = vmatmul.f32.gmra.mxu0 %v159
    %v178 = vpop.f32.mrf.mxu0
    %v179 = vadd.f32 %v155, %v178
    %180 = vdwg.mxu0
    %s181 = scalar_lea.vmem [#allocation7], 64
    %v182 = vld [vmem:[%s181] sm:$0xff]
    %v183 = vld [vmem:[%s181 + $0x8] sm:$0xff]
    %v184 = vld [vmem:[%s181 + $0x10] sm:$0xff]
    %v185 = vld [vmem:[%s181 + $0x18] sm:$0xff]
    %s186 = scalar_lea.vmem [#allocation8], 2
    %v187 = vld [vmem:[%s186] sm:$0x1]
    %v189 = vperm.slane %v187, 0
    %191 = vrot.lane.b32.xlu0 %v115, 64
    %v192 = vpop.permute.xlu0 %191
    %v193 = vsel %vm91, %v192, 0
    %195 = vmatpush.msra.mxu0 0.0
    %196 = vmatpush.msra.mxu0 0.0
    %197 = vmatpush.msra.mxu0 0.0
    %198 = vmatpush.msra.mxu0 0.0
    %199 = vmatpush.msra.mxu0 0.0
    %200 = vmatpush.msra.mxu0 0.0
    %201 = vmatpush.msra.mxu0 0.0
    %202 = vmatpush.msra.mxu0 0.0
    %203 = vmatpush.msra.mxu0 0.0
    %204 = vmatpush.msra.mxu0 0.0
    %205 = vmatpush.msra.mxu0 0.0
    %206 = vmatpush.msra.mxu0 0.0
    %207 = vmatpush.msra.mxu0 %v185
    %208 = vmatpush.msra.mxu0 %v184
    %209 = vmatpush.msra.mxu0 %v183
    %210 = vmatpush.msra.mxu0 %v182
    %211 = vmatmul.f32.gmra.mxu0 %v193
    %v212 = vpop.f32.mrf.mxu0
    %v213 = vadd.f32 %v189, %v212
    %214 = vdwg.mxu0
    %s215 = scalar_lea.vmem [#allocation7], 96
    %v216 = vld [vmem:[%s215] sm:$0xff]
    %v217 = vld [vmem:[%s215 + $0x8] sm:$0xff]
    %v218 = vld [vmem:[%s215 + $0x10] sm:$0xff]
    %v219 = vld [vmem:[%s215 + $0x18] sm:$0xff]
    %s220 = scalar_lea.vmem [#allocation8], 3
    %v221 = vld [vmem:[%s220] sm:$0x1]
    %v223 = vperm.slane %v221, 0
    %225 = vrot.lane.b32.xlu0 %v115, 32
    %v226 = vpop.permute.xlu0 %225
    %v227 = vsel %vm91, %v226, 0
    %229 = vmatpush.msra.mxu0 0.0
    %230 = vmatpush.msra.mxu0 0.0
    %231 = vmatpush.msra.mxu0 0.0
    %232 = vmatpush.msra.mxu0 0.0
    %233 = vmatpush.msra.mxu0 0.0
    %234 = vmatpush.msra.mxu0 0.0
    %235 = vmatpush.msra.mxu0 0.0
    %236 = vmatpush.msra.mxu0 0.0
    %237 = vmatpush.msra.mxu0 0.0
    %238 = vmatpush.msra.mxu0 0.0
    %239 = vmatpush.msra.mxu0 0.0
    %240 = vmatpush.msra.mxu0 0.0
    %241 = vmatpush.msra.mxu0 %v219
    %242 = vmatpush.msra.mxu0 %v218
    %243 = vmatpush.msra.mxu0 %v217
    %244 = vmatpush.msra.mxu0 %v216
    %245 = vmatmul.f32.gmra.mxu0 %v227
    %v246 = vpop.f32.mrf.mxu0
    %v247 = vadd.f32 %v223, %v246
    %248 = vdwg.mxu0
    %250 = vrot.lane.b32.xlu0 %v179, 32
    %v251 = vpop.permute.xlu0 %250
    %254 = vrot.lane.b32.xlu0 %v213, 64
    %v255 = vpop.permute.xlu0 %254
    %258 = vrot.lane.b32.xlu0 %v247, 96
    %v259 = vpop.permute.xlu0 %258
    %v261 = vsel %vm91, %v145, %v251
    %vm262 = vcmask 523264
    %v263 = vsel %vm262, %v261, %v255
    %vm264 = vcmask 785408
    %v265 = vsel %vm264, %v263, %v259
    %v267 = vrot.slane %v265, 1
    %269 = vst [vmem:[#allocation10] sm:$0x1] %v265
    %270 = vst [vmem:[#allocation10 + $0x1] sm:$0x1] %v267
    // Predicated region
    $region38: #{tpu_custom_call.1} parent=1 // pred_check
      _
    $region39: #{tpu_custom_call.1} parent=1 // pred_check_branch
      %272 = sbr.rel (0) target = $region41
    $region40: #{tpu_custom_call.1} parent=1 // pred_region
      %274 = vsyncadd [#allocation4], 0
      %s275 = sshll.u32 [#allocation10], 4
      %s276 = int_to_ptr.vmem [resolvable:$true] %s275
      %s277 = sshll.u32 %s5, 4
      %s278 = int_to_ptr.hbm [resolvable:$true] %s277
      %283 = dma.vmem_to_hbm [thread:$0]  %s276, 32, %s278, [#allocation4], 16, 16, 1
    $region41: #{tpu_custom_call.1} parent=1 // pred_fallthru
      _
    // Predicated region
    $region42: #{tpu_custom_call.1} parent=1 // pred_check
      _
    $region43: #{tpu_custom_call.1} parent=1 // pred_check_branch
      %285 = sbr.rel (0) target = $region45
    $region44: #{tpu_custom_call.1} parent=1 // pred_region
      %287 = dma.done [#allocation4], 32
    $region45: #{tpu_custom_call.1} parent=1 // pred_fallthru
      _
    %288 = vsyncpa [#allocation3], 1
    %289 = vsyncpa [#allocation6], 1
    %290 = vsyncpa [#allocation9], 1
    %291 = vsyncpa [#allocation4], 1

</llo_original>
